<compile_context>
chip_gen: v7x
topology: tpu7x:2x2x1
jax: 0.10.0
libtpu: 0.0.40
codegen_flags: <defaults>
</compile_context>

<pallas_src>
import numpy as np
import jax
import jax.numpy as jnp
from jax.experimental import pallas as pl
from jax.experimental.pallas import tpu as pltpu

# ------------------------- "CONFIG" (deterministic, in-script) ---------------
RL_SOFTMAX_STEP_SIZE = 1.0
MISC_PATCH_SIZE = (16, 16)
STEP_SZ = int(RL_SOFTMAX_STEP_SIZE * MISC_PATCH_SIZE[0])  # = 16
INV_STEP_SZ = 1.0 / STEP_SZ                               # exact (power of two)

# neighbor offsets in the order the PyTorch code checks them (index i -> x_fc[0, i])
NEIGHBOR_OFFSETS = [(1, 0), (1, -1), (0, -1), (-1, -1), (-1, 0), (-1, 1), (0, 1), (1, 1)]

CHUNK_MAX = 1024   # agents (lanes) per grid step; multiple of 128


# ------------------------------ Pallas kernel --------------------------------
def random_agent_kernel(steps_ref, locs_ref, out_ref):
    """One grid step == one chunk of C agents, all vectorized on the lane axis.

    steps_ref : VMEM (1, C)    int32   current step per agent
    locs_ref  : VMEM (2, T, C) float32 row0 = x, row1 = y; T on sublanes, agents on lanes
    out_ref   : VMEM (8, C)    float32 action mask, actions on sublanes, agents on lanes
    """
    T = locs_ref.shape[1]
    C = locs_ref.shape[2]

    # Quantize: multiply by the exact reciprocal of 16 (power of two -> bit-exact),
    # then trunc-cast, matching torch's (locs / 16).int().
    locs_q = (locs_ref[...] * INV_STEP_SZ).astype(jnp.int32)          # (2, T, C)
    x_q = locs_q[0]                                                    # (T, C)
    y_q = locs_q[1]                                                    # (T, C)

    step = steps_ref[...]                                              # (1, C)

    # Current location per agent: masked sublane (T-axis) reduce, per lane.
    t_idx = jax.lax.broadcasted_iota(jnp.int32, (T, C), 0)             # (T, C)
    at_step = t_idx == step                                            # (T, C)
    loc_x = jnp.sum(jnp.where(at_step, x_q, 0), axis=0, keepdims=True)  # (1, C)
    loc_y = jnp.sum(jnp.where(at_step, y_q, 0), axis=0, keepdims=True)  # (1, C)

    # Boundary mask, (8, C): actions on sublanes, agents on lanes.
    row = jax.lax.broadcasted_iota(jnp.int32, (8, C), 0)                # (8, C)
    xb = jnp.ones((8, C), jnp.float32)
    # loc[0] <= 0 -> zero actions {0, 1, 7}
    xb = jnp.where((loc_x <= 0) & ((row < 2) | (row == 7)), 0.0, xb)
    # loc[1] <= 0 -> zero actions {5, 6, 7}
    xb = jnp.where((loc_y <= 0) & (row >= 5), 0.0, xb)
    # loc[0] >= 4 -> zero actions {3, 4, 5}
    xb = jnp.where((loc_x >= 4) & (row >= 3) & (row < 6), 0.0, xb)
    # loc[1] >= 4 -> zero actions {1, 2, 3}
    xb = jnp.where((loc_y >= 4) & (row >= 1) & (row < 4), 0.0, xb)

    # Neighbor offsets rebuilt from the action index (no captured constant arrays):
    #   dx = [1, 1, 0, -1, -1, -1, 0, 1],  dy = [0, -1, -1, -1, 0, 1, 1, 1]
    row3 = jax.lax.broadcasted_iota(jnp.int32, (8, 1, C), 0)            # (8, 1, C)
    dx3 = jnp.where((row3 < 2) | (row3 == 7), 1,
                    jnp.where((row3 >= 3) & (row3 < 6), -1, 0))
    dy3 = jnp.where((row3 >= 1) & (row3 < 4), -1,
                    jnp.where(row3 >= 5, 1, 0))

    # Visited check: ONE (8, T, C) compare + ONE sublane reduce for all agents
    # and all 8 offsets at once.
    tx3 = loc_x.reshape(1, 1, C) - dx3                                  # (8, 1, C)
    ty3 = loc_y.reshape(1, 1, C) - dy3                                  # (8, 1, C)
    x_q3 = x_q.reshape(1, T, C)
    y_q3 = y_q.reshape(1, T, C)
    valid3 = (t_idx < step).reshape(1, T, C)                            # (1, T, C)
    hit = (x_q3 == tx3) & (y_q3 == ty3) & valid3                        # (8, T, C)
    visited = jnp.any(hit, axis=1)                                      # (8, C)

    # step == 0: `valid3` is all False, so visited is all False and x_vis == xb,
    # reproducing the early-return of the PyTorch module.
    x_vis = jnp.where(visited, 0.0, xb)                                 # (8, C)
    all_zero = jnp.sum(x_vis, axis=0, keepdims=True) == 0.0             # (1, C)
    out_ref[...] = jnp.where(all_zero, xb, x_vis)                       # one lane-dense store


# ------------------------------- wrappers -------------------------------------
def random_agent_forward_batched(locs, steps):
    """locs: (B, T, >=2) float, steps: (B,) int. Returns (B, 8) float32 action masks."""
    locs = jnp.asarray(locs, jnp.float32)
    B, T = locs.shape[0], locs.shape[1]
    steps = jnp.asarray(steps, jnp.int32).reshape(B)

    # Lane-dense layout: agents on the 128-lane axis, episode step on sublanes.
    locs_ltb = jnp.transpose(locs[..., :2], (2, 1, 0))                  # (2, T, B)

    # Pad agents to a lane multiple so the single output tile is unmasked and
    # chunked blocks (large B) satisfy the (8, 128) rule.
    Bp = max(128, ((B + 127) // 128) * 128)
    chunk = min(CHUNK_MAX, Bp)
    n_chunks = pl.cdiv(Bp, chunk)
    Bp = n_chunks * chunk
    pad = Bp - B
    if pad:
        locs_ltb = jnp.pad(locs_ltb, ((0, 0), (0, 0), (0, pad)))
        steps = jnp.pad(steps, (0, pad))
    steps_row = steps.reshape(1, Bp)

    out = pl.pallas_call(
        random_agent_kernel,
        out_shape=jax.ShapeDtypeStruct((8, Bp), jnp.float32),
        grid=(n_chunks,),                                               # 1 step for small/medium B
        in_specs=[
            pl.BlockSpec((1, chunk), lambda c: (0, c)),                 # steps row
            pl.BlockSpec((2, T, chunk), lambda c: (0, 0, c)),           # locs chunk
        ],
        out_specs=pl.BlockSpec((8, chunk), lambda c: (0, c)),
        compiler_params=pltpu.CompilerParams(
            dimension_semantics=("arbitrary",)),
    )(steps_row, locs_ltb)
    return out[:, :B].T                                                 # (B, 8)


def random_agent_forward(locs, step):
    """Single-episode API matching RandomAgent.forward: returns (x_fc [1,8] f32, None)."""
    locs = jnp.asarray(locs, jnp.float32)
    x = random_agent_forward_batched(locs[None, :, :2],
                                     jnp.asarray(step, jnp.int32).reshape(1))
    return x[0:1, :], None


# ------------------------------ numpy reference ------------------------------
def reference_forward(locs_np, step):
    locs_q = (locs_np[:, :2] / STEP_SZ).astype(np.int32)
    visited = locs_q[:step]
    loc = locs_q[step]

    def bounds(x):
        if loc[0] <= 0:
            x[0, -1] = 0
            x[0, :2] = 0
        if loc[1] <= 0:
            x[0, 5:] = 0
        if loc[0] >= 4:
            x[0, 3:6] = 0
        if loc[1] >= 4:
            x[0, 1:4] = 0
        return x

    x = bounds(np.ones((1, 8), np.float32))
    if step == 0:
        return x

    def has_visited(t):
        return bool(np.any(np.all(visited == t, axis=1))) if visited.shape[0] > 0 else False

    for i, (dx, dy) in enumerate(NEIGHBOR_OFFSETS):
        if has_visited(loc - np.array([dx, dy], dtype=np.int32)):
            x[0, i] = 0
    if x.sum() == 0:
        x = bounds(np.ones((1, 8), np.float32))
    return x


# ----------------------------------- main ------------------------------------
if __name__ == "__main__":
    key = jax.random.PRNGKey(0)
    T = 8   # episode length
    B = 4   # batched agents

    # deterministic grid coordinates in [0, 5), placed inside their cell
    grid_coords = jax.random.randint(key, (B, T, 2), 0, 5)
    locs = grid_coords.astype(jnp.float32) * STEP_SZ + 1.0              # (B, T, 2)
    steps = [5, 0, 3, 7]                                                # includes step==0 path

    masks = jax.block_until_ready(
        random_agent_forward_batched(locs, jnp.array(steps, jnp.int32)))

    locs_np = np.asarray(locs)
    for b in range(B):
        exp = reference_forward(locs_np[b], steps[b])
        np.testing.assert_allclose(np.asarray(masks[b:b + 1]), exp, rtol=0, atol=0)

    # single-episode API (matches RandomAgent.forward(episode) -> (x_fc, None))
    x_fc, _ = random_agent_forward(locs[0], 5)
    x_fc = jax.block_until_ready(x_fc)
    np.testing.assert_allclose(np.asarray(x_fc), reference_forward(locs_np[0], 5),
                               rtol=0, atol=0)

    print("KERNEL_OK")
</pallas_src>

<mosaic_0001>
module attributes {stable_mosaic.version = 11 : i64} {
  func.func @random_agent_kernel(%arg0: i32, %arg1: memref<1x128xi32, #tpu.memory_space<vmem>>, %arg2: memref<2x8x128xf32, #tpu.memory_space<vmem>>, %arg3: memref<8x128xf32, #tpu.memory_space<vmem>>) attributes {dimension_semantics = [#tpu.dimension_semantics<arbitrary>], iteration_bounds = array<i64: 1>, scalar_prefetch = 0 : i64, scratch_operands = 0 : i64, tpu.core_type = #tpu.core_type<tc>, window_params = [{transform_indices = @transform_0, window_bounds = array<i64: 1, 128>}, {transform_indices = @transform_1, window_bounds = array<i64: 2, 8, 128>}, {transform_indices = @transform_2, window_bounds = array<i64: 8, 128>}]} {
    %c0 = arith.constant 0 : index
    %c0_0 = arith.constant 0 : index
    %c0_1 = arith.constant 0 : index
    %0 = vector.load %arg2[%c0, %c0_0, %c0_1] : memref<2x8x128xf32, #tpu.memory_space<vmem>>, vector<2x8x128xf32>
    %cst = arith.constant 6.250000e-02 : f32
    %1 = vector.broadcast %cst : f32 to vector<2x8x128xf32>
    %2 = arith.mulf %0, %1 : vector<2x8x128xf32>
    %3 = arith.fptosi %2 : vector<2x8x128xf32> to vector<2x8x128xi32>
    %4 = vector.extract_strided_slice %3 {offsets = [0, 0, 0], sizes = [1, 8, 128], strides = [1, 1, 1]} : vector<2x8x128xi32> to vector<1x8x128xi32>
    %5 = vector.shape_cast %4 : vector<1x8x128xi32> to vector<8x128xi32>
    %6 = vector.extract_strided_slice %3 {offsets = [1, 0, 0], sizes = [1, 8, 128], strides = [1, 1, 1]} : vector<2x8x128xi32> to vector<1x8x128xi32>
    %7 = vector.shape_cast %6 : vector<1x8x128xi32> to vector<8x128xi32>
    %c0_2 = arith.constant 0 : index
    %c0_3 = arith.constant 0 : index
    %8 = vector.load %arg1[%c0_2, %c0_3] : memref<1x128xi32, #tpu.memory_space<vmem>>, vector<1x128xi32>
    %9 = tpu.iota {dimensions = array<i32: 0>} : vector<8x128xi32>
    %10 = vector.broadcast %8 : vector<1x128xi32> to vector<8x128xi32>
    %11 = arith.cmpi eq, %9, %10 : vector<8x128xi32>
    %c0_i32 = arith.constant 0 : i32
    %12 = vector.broadcast %c0_i32 : i32 to vector<8x128xi32>
    %13 = arith.select %11, %5, %12 : vector<8x128xi1>, vector<8x128xi32>
    %cst_4 = arith.constant dense<0> : vector<128xi32>
    %14 = vector.multi_reduction <add>, %13, %cst_4 [0] : vector<8x128xi32> to vector<128xi32>
    %15 = vector.shape_cast %14 : vector<128xi32> to vector<1x128xi32>
    %c0_i32_5 = arith.constant 0 : i32
    %16 = vector.broadcast %c0_i32_5 : i32 to vector<8x128xi32>
    %17 = arith.select %11, %7, %16 : vector<8x128xi1>, vector<8x128xi32>
    %cst_6 = arith.constant dense<0> : vector<128xi32>
    %18 = vector.multi_reduction <add>, %17, %cst_6 [0] : vector<8x128xi32> to vector<128xi32>
    %19 = vector.shape_cast %18 : vector<128xi32> to vector<1x128xi32>
    %20 = tpu.iota {dimensions = array<i32: 0>} : vector<8x128xi32>
    %cst_7 = arith.constant 1.000000e+00 : f32
    %21 = vector.broadcast %cst_7 : f32 to vector<8x128xf32>
    %c0_i32_8 = arith.constant 0 : i32
    %22 = vector.broadcast %c0_i32_8 : i32 to vector<1x128xi32>
    %23 = arith.cmpi sle, %15, %22 : vector<1x128xi32>
    %c2_i32 = arith.constant 2 : i32
    %24 = vector.broadcast %c2_i32 : i32 to vector<8x128xi32>
    %25 = arith.cmpi slt, %20, %24 : vector<8x128xi32>
    %c7_i32 = arith.constant 7 : i32
    %26 = vector.broadcast %c7_i32 : i32 to vector<8x128xi32>
    %27 = arith.cmpi eq, %20, %26 : vector<8x128xi32>
    %28 = arith.ori %25, %27 : vector<8x128xi1>
    %29 = vector.broadcast %23 : vector<1x128xi1> to vector<8x128xi1>
    %30 = arith.andi %29, %28 : vector<8x128xi1>
    %cst_9 = arith.constant 0.000000e+00 : f32
    %31 = vector.broadcast %cst_9 : f32 to vector<8x128xf32>
    %32 = arith.select %30, %31, %21 : vector<8x128xi1>, vector<8x128xf32>
    %c0_i32_10 = arith.constant 0 : i32
    %33 = vector.broadcast %c0_i32_10 : i32 to vector<1x128xi32>
    %34 = arith.cmpi sle, %19, %33 : vector<1x128xi32>
    %c5_i32 = arith.constant 5 : i32
    %35 = vector.broadcast %c5_i32 : i32 to vector<8x128xi32>
    %36 = arith.cmpi sge, %20, %35 : vector<8x128xi32>
    %37 = vector.broadcast %34 : vector<1x128xi1> to vector<8x128xi1>
    %38 = arith.andi %37, %36 : vector<8x128xi1>
    %cst_11 = arith.constant 0.000000e+00 : f32
    %39 = vector.broadcast %cst_11 : f32 to vector<8x128xf32>
    %40 = arith.select %38, %39, %32 : vector<8x128xi1>, vector<8x128xf32>
    %c4_i32 = arith.constant 4 : i32
    %41 = vector.broadcast %c4_i32 : i32 to vector<1x128xi32>
    %42 = arith.cmpi sge, %15, %41 : vector<1x128xi32>
    %c3_i32 = arith.constant 3 : i32
    %43 = vector.broadcast %c3_i32 : i32 to vector<8x128xi32>
    %44 = arith.cmpi sge, %20, %43 : vector<8x128xi32>
    %45 = vector.broadcast %42 : vector<1x128xi1> to vector<8x128xi1>
    %46 = arith.andi %45, %44 : vector<8x128xi1>
    %c6_i32 = arith.constant 6 : i32
    %47 = vector.broadcast %c6_i32 : i32 to vector<8x128xi32>
    %48 = arith.cmpi slt, %20, %47 : vector<8x128xi32>
    %49 = arith.andi %46, %48 : vector<8x128xi1>
    %cst_12 = arith.constant 0.000000e+00 : f32
    %50 = vector.broadcast %cst_12 : f32 to vector<8x128xf32>
    %51 = arith.select %49, %50, %40 : vector<8x128xi1>, vector<8x128xf32>
    %c4_i32_13 = arith.constant 4 : i32
    %52 = vector.broadcast %c4_i32_13 : i32 to vector<1x128xi32>
    %53 = arith.cmpi sge, %19, %52 : vector<1x128xi32>
    %c1_i32 = arith.constant 1 : i32
    %54 = vector.broadcast %c1_i32 : i32 to vector<8x128xi32>
    %55 = arith.cmpi sge, %20, %54 : vector<8x128xi32>
    %56 = vector.broadcast %53 : vector<1x128xi1> to vector<8x128xi1>
    %57 = arith.andi %56, %55 : vector<8x128xi1>
    %c4_i32_14 = arith.constant 4 : i32
    %58 = vector.broadcast %c4_i32_14 : i32 to vector<8x128xi32>
    %59 = arith.cmpi slt, %20, %58 : vector<8x128xi32>
    %60 = arith.andi %57, %59 : vector<8x128xi1>
    %cst_15 = arith.constant 0.000000e+00 : f32
    %61 = vector.broadcast %cst_15 : f32 to vector<8x128xf32>
    %62 = arith.select %60, %61, %51 : vector<8x128xi1>, vector<8x128xf32>
    %63 = tpu.iota {dimensions = array<i32: 0>} : vector<8x1x128xi32>
    %c2_i32_16 = arith.constant 2 : i32
    %64 = vector.broadcast %c2_i32_16 : i32 to vector<8x1x128xi32>
    %65 = arith.cmpi slt, %63, %64 : vector<8x1x128xi32>
    %c7_i32_17 = arith.constant 7 : i32
    %66 = vector.broadcast %c7_i32_17 : i32 to vector<8x1x128xi32>
    %67 = arith.cmpi eq, %63, %66 : vector<8x1x128xi32>
    %68 = arith.ori %65, %67 : vector<8x1x128xi1>
    %c3_i32_18 = arith.constant 3 : i32
    %69 = vector.broadcast %c3_i32_18 : i32 to vector<8x1x128xi32>
    %70 = arith.cmpi sge, %63, %69 : vector<8x1x128xi32>
    %c6_i32_19 = arith.constant 6 : i32
    %71 = vector.broadcast %c6_i32_19 : i32 to vector<8x1x128xi32>
    %72 = arith.cmpi slt, %63, %71 : vector<8x1x128xi32>
    %73 = arith.andi %70, %72 : vector<8x1x128xi1>
    %c-1_i32 = arith.constant -1 : i32
    %c0_i32_20 = arith.constant 0 : i32
    %74 = vector.broadcast %c-1_i32 : i32 to vector<8x1x128xi32>
    %75 = vector.broadcast %c0_i32_20 : i32 to vector<8x1x128xi32>
    %76 = arith.select %73, %74, %75 : vector<8x1x128xi1>, vector<8x1x128xi32>
    %c1_i32_21 = arith.constant 1 : i32
    %77 = vector.broadcast %c1_i32_21 : i32 to vector<8x1x128xi32>
    %78 = arith.select %68, %77, %76 : vector<8x1x128xi1>, vector<8x1x128xi32>
    %c1_i32_22 = arith.constant 1 : i32
    %79 = vector.broadcast %c1_i32_22 : i32 to vector<8x1x128xi32>
    %80 = arith.cmpi sge, %63, %79 : vector<8x1x128xi32>
    %c4_i32_23 = arith.constant 4 : i32
    %81 = vector.broadcast %c4_i32_23 : i32 to vector<8x1x128xi32>
    %82 = arith.cmpi slt, %63, %81 : vector<8x1x128xi32>
    %83 = arith.andi %80, %82 : vector<8x1x128xi1>
    %c5_i32_24 = arith.constant 5 : i32
    %84 = vector.broadcast %c5_i32_24 : i32 to vector<8x1x128xi32>
    %85 = arith.cmpi sge, %63, %84 : vector<8x1x128xi32>
    %c1_i32_25 = arith.constant 1 : i32
    %c0_i32_26 = arith.constant 0 : i32
    %86 = vector.broadcast %c1_i32_25 : i32 to vector<8x1x128xi32>
    %87 = vector.broadcast %c0_i32_26 : i32 to vector<8x1x128xi32>
    %88 = arith.select %85, %86, %87 : vector<8x1x128xi1>, vector<8x1x128xi32>
    %c-1_i32_27 = arith.constant -1 : i32
    %89 = vector.broadcast %c-1_i32_27 : i32 to vector<8x1x128xi32>
    %90 = arith.select %83, %89, %88 : vector<8x1x128xi1>, vector<8x1x128xi32>
    %91 = vector.shape_cast %15 : vector<1x128xi32> to vector<1x1x128xi32>
    %92 = vector.broadcast %91 : vector<1x1x128xi32> to vector<8x1x128xi32>
    %93 = arith.subi %92, %78 : vector<8x1x128xi32>
    %94 = vector.shape_cast %19 : vector<1x128xi32> to vector<1x1x128xi32>
    %95 = vector.broadcast %94 : vector<1x1x128xi32> to vector<8x1x128xi32>
    %96 = arith.subi %95, %90 : vector<8x1x128xi32>
    %97 = vector.shape_cast %5 : vector<8x128xi32> to vector<1x8x128xi32>
    %98 = vector.shape_cast %7 : vector<8x128xi32> to vector<1x8x128xi32>
    %99 = vector.broadcast %8 : vector<1x128xi32> to vector<8x128xi32>
    %100 = arith.cmpi slt, %9, %99 : vector<8x128xi32>
    %101 = vector.shape_cast %100 : vector<8x128xi1> to vector<1x8x128xi1>
    %102 = vector.broadcast %97 : vector<1x8x128xi32> to vector<8x8x128xi32>
    %103 = vector.broadcast %93 : vector<8x1x128xi32> to vector<8x8x128xi32>
    %104 = arith.cmpi eq, %102, %103 : vector<8x8x128xi32>
    %105 = vector.broadcast %98 : vector<1x8x128xi32> to vector<8x8x128xi32>
    %106 = vector.broadcast %96 : vector<8x1x128xi32> to vector<8x8x128xi32>
    %107 = arith.cmpi eq, %105, %106 : vector<8x8x128xi32>
    %108 = arith.andi %104, %107 : vector<8x8x128xi1>
    %109 = vector.broadcast %101 : vector<1x8x128xi1> to vector<8x8x128xi1>
    %110 = arith.andi %108, %109 : vector<8x8x128xi1>
    %cst_28 = arith.constant 1.000000e+00 : f32
    %cst_29 = arith.constant 0.000000e+00 : f32
    %111 = vector.broadcast %cst_28 : f32 to vector<8x8x128xf32>
    %112 = vector.broadcast %cst_29 : f32 to vector<8x8x128xf32>
    %113 = arith.select %110, %111, %112 : vector<8x8x128xi1>, vector<8x8x128xf32>
    %cst_30 = arith.constant dense<0xFF800000> : vector<8x128xf32>
    %114 = vector.multi_reduction <maximumf>, %113, %cst_30 [1] : vector<8x8x128xf32> to vector<8x128xf32>
    %cst_31 = arith.constant 0.000000e+00 : f32
    %115 = vector.broadcast %cst_31 : f32 to vector<8x128xf32>
    %116 = arith.cmpf ogt, %114, %115 : vector<8x128xf32>
    %cst_32 = arith.constant 0.000000e+00 : f32
    %117 = vector.broadcast %cst_32 : f32 to vector<8x128xf32>
    %118 = arith.select %116, %117, %62 : vector<8x128xi1>, vector<8x128xf32>
    %cst_33 = arith.constant dense<0.000000e+00> : vector<128xf32>
    %119 = vector.multi_reduction <add>, %118, %cst_33 [0] : vector<8x128xf32> to vector<128xf32>
    %120 = vector.shape_cast %119 : vector<128xf32> to vector<1x128xf32>
    %cst_34 = arith.constant 0.000000e+00 : f32
    %121 = vector.broadcast %cst_34 : f32 to vector<1x128xf32>
    %122 = arith.cmpf oeq, %120, %121 : vector<1x128xf32>
    %123 = vector.shape_cast %122 : vector<1x128xi1> to vector<1x128xi1>
    %124 = vector.broadcast %123 : vector<1x128xi1> to vector<8x128xi1>
    %125 = arith.select %124, %62, %118 : vector<8x128xi1>, vector<8x128xf32>
    %c0_35 = arith.constant 0 : index
    %c0_36 = arith.constant 0 : index
    %126 = vector.load %arg3[%c0_35, %c0_36] : memref<8x128xf32, #tpu.memory_space<vmem>>, vector<8x128xf32>
    tpu.vector_store %arg3[%c0_35, %c0_36], %125 {strides = array<i32>} : memref<8x128xf32, #tpu.memory_space<vmem>>, vector<8x128xf32>,
    return
  }
  func.func @transform_0(%arg0: i32) -> (i32, i32) {
    %c0_i32 = arith.constant 0 : i32
    %c0_i32_0 = arith.constant 0 : i32
    return %c0_i32, %arg0 : i32, i32
  }
  func.func @transform_1(%arg0: i32) -> (i32, i32, i32) {
    %c0_i32 = arith.constant 0 : i32
    %c0_i32_0 = arith.constant 0 : i32
    %c0_i32_1 = arith.constant 0 : i32
    return %c0_i32, %c0_i32_0, %arg0 : i32, i32, i32
  }
  func.func @transform_2(%arg0: i32) -> (i32, i32) {
    %c0_i32 = arith.constant 0 : i32
    %c0_i32_0 = arith.constant 0 : i32
    return %c0_i32, %arg0 : i32, i32
  }
}

</mosaic_0001>

<llo_original>
// kernel: tpu_custom_call.1
$region0: #{tpu_custom_call.1}
  #allocation0 [shape = 'u32[]', space=smem, size = 0x4, offset = 0x4, fixed_abs, tag = 'smem constant byte address 0x4 - core index']
  #allocation1 [shape = 'u32[144,128]{1,0:T(1,128)}', space=vmem, size = 0x12000, scoped, tag = 'internal scratch']
  %s0 = inlined_call_operand.hbm [shape: s32[1,128], index: 0, kind: input, shape index: {}]
  %s1 = inlined_call_operand.hbm [shape: f32[2,8,128], index: 1, kind: input, shape index: {}]
  %s2 = inlined_call_operand.hbm [shape: f32[8,128], index: 2, kind: output, shape index: {}]
  %s3 = sld [smem:[#allocation0]]
  $region26: #{tpu_custom_call.1} parent=0
    _
  %s5 = ssub.s32 1, %s3
  %s6 = scalar_select 0, %s5, %s3
  $region1: #{tpu_custom_call.1} parent=0
    #allocation2 [shape = 'u8[512]{0}', space=vmem, size = 0x400, scoped, tag = 'input window, operand 0, single buffered']
    #allocation3 [shape = 's32[1]{0}', space=sflag, size = 0x4, scoped, tag = 'scoped memory for tpu_custom_call.1']
    #allocation4 [shape = 's32[1]{0}', space=sflag, size = 0x4, scoped, tag = 'scoped memory for tpu_custom_call.1']
    #allocation5 [shape = 'u8[8192]{0}', space=vmem, size = 0x2000, scoped, tag = 'input window, operand 1, single buffered']
    #allocation6 [shape = 's32[1]{0}', space=sflag, size = 0x4, scoped, tag = 'scoped memory for tpu_custom_call.1']
    #allocation7 [shape = 'u8[4096]{0}', space=vmem, size = 0x1000, scoped, tag = 'output window, operand 0, single buffered']
    %7 = vsyncpa [#allocation3], 0
    %8 = vsyncpa [#allocation6], 0
    %9 = vsyncpa [#allocation4], 0
    // Predicated region
    $region2: #{tpu_custom_call.1} parent=1 // pred_check
      _
    $region3: #{tpu_custom_call.1} parent=1 // pred_check_branch
      %11 = sbr.rel (0) target = $region5
    $region4: #{tpu_custom_call.1} parent=1 // pred_region
      %s13 = ssub.s32 16, 16
      %14 = vsyncadd [#allocation3], %s13
      %s16 = sshll.u32 [#allocation2], 4
      %s17 = int_to_ptr.vmem [resolvable:$true] %s16
      %19 = dma.hbm_to_vmem [thread:$0]  %s0, 16, %s17, [#allocation3]
    $region5: #{tpu_custom_call.1} parent=1 // pred_fallthru
      _
    // Predicated region
    $region6: #{tpu_custom_call.1} parent=1 // pred_check
      _
    $region7: #{tpu_custom_call.1} parent=1 // pred_check_branch
      %21 = sbr.rel (0) target = $region9
    $region8: #{tpu_custom_call.1} parent=1 // pred_region
      %s23 = ssub.s32 256, 256
      %24 = vsyncadd [#allocation6], %s23
      %s25 = sshll.u32 [#allocation5], 4
      %s26 = int_to_ptr.vmem [resolvable:$true] %s25
      %31 = dma.hbm_to_vmem [thread:$0]  %s1, 256, %s26, [#allocation6], 128, 128, 8
    $region9: #{tpu_custom_call.1} parent=1 // pred_fallthru
      _
    // Predicated region
    $region10: #{tpu_custom_call.1} parent=1 // pred_check
      _
    $region11: #{tpu_custom_call.1} parent=1 // pred_check_branch
      %33 = sbr.rel (0) target = $region13
    $region12: #{tpu_custom_call.1} parent=1 // pred_region
      %34 = dma.done [#allocation3], 16
    $region13: #{tpu_custom_call.1} parent=1 // pred_fallthru
      _
    // Predicated region
    $region14: #{tpu_custom_call.1} parent=1 // pred_check
      _
    $region15: #{tpu_custom_call.1} parent=1 // pred_check_branch
      %36 = sbr.rel (0) target = $region17
    $region16: #{tpu_custom_call.1} parent=1 // pred_region
      %37 = dma.done [#allocation6], 256
    $region17: #{tpu_custom_call.1} parent=1 // pred_fallthru
      _
    %v38 = vld [vmem:[#allocation5] sm:$0xff]
    %v39 = vld [vmem:[#allocation5 + $0x8] sm:$0xff]
    %v40 = vmul.f32 %v38, 0.0625
    %v41 = vmul.f32 %v39, 0.0625
    %v42 = vcvt.f32.s32.to.zero.pseudo %v40
    %v43 = vcvt.f32.s32.to.zero.pseudo %v41
    %v44 = vld [vmem:[#allocation2] sm:$0x1]
    %v45 = vlaneseq
    %v46 = vshrl.u32 %v45, 7
    %v47 = vlaneseq
    %v48 = vshrl.u32 %v47, 7
    %v49 = vsub.s32 0, %v48
    %v50 = vrot.slane %v44, %v49
    %vm51 = vcmp.eq.s32.totalorder %v46, %v50
    %v52 = vsel %vm51, %v42, 0
    %v53 = vrot.slane %v52, 4
    %v54 = vadd.s32 %v52, %v53
    %v55 = vrot.slane %v54, 2
    %v56 = vadd.s32 %v54, %v55
    %v57 = vrot.slane %v56, 1
    %v58 = vadd.s32 %v56, %v57
    %v59 = vsel %vm51, %v43, 0
    %v60 = vrot.slane %v59, 4
    %v61 = vadd.s32 %v59, %v60
    %v62 = vrot.slane %v61, 2
    %v63 = vadd.s32 %v61, %v62
    %v64 = vrot.slane %v63, 1
    %v65 = vadd.s32 %v63, %v64
    %vm66 = vcmp.le.s32.totalorder %v58, 0
    %vm67 = vcmp.lt.s32.totalorder %v46, 2
    %vm68 = vcmp.eq.s32.totalorder %v46, 7
    %vm69 = vmor %vm67, %vm68
    %v70 = vsel %vm66, 1, 0
    %vm71 = vcmp.eq.s32.totalorder %v70, 1
    %vm72 = vmand %vm71, %vm69
    %v73 = vsel %vm72, 0.0, 1.0
    %vm74 = vcmp.le.s32.totalorder %v65, 0
    %vm75 = vcmp.ge.s32.totalorder %v46, 5
    %v76 = vsel %vm74, 1, 0
    %vm77 = vcmp.eq.s32.totalorder %v76, 1
    %vm78 = vmand %vm77, %vm75
    %v79 = vsel %vm78, 0.0, %v73
    %vm80 = vcmp.ge.s32.totalorder %v58, 4
    %vm81 = vcmp.ge.s32.totalorder %v46, 3
    %v82 = vsel %vm80, 1, 0
    %vm83 = vcmp.eq.s32.totalorder %v82, 1
    %vm84 = vmand %vm83, %vm81
    %vm85 = vcmp.lt.s32.totalorder %v46, 6
    %vm86 = vmand %vm84, %vm85
    %v87 = vsel %vm86, 0.0, %v79
    %vm88 = vcmp.ge.s32.totalorder %v65, 4
    %vm89 = vcmp.ge.s32.totalorder %v46, 1
    %v90 = vsel %vm88, 1, 0
    %vm91 = vcmp.eq.s32.totalorder %v90, 1
    %vm92 = vmand %vm91, %vm89
    %vm93 = vcmp.lt.s32.totalorder %v46, 4
    %vm94 = vmand %vm92, %vm93
    %v95 = vsel %vm94, 0.0, %v87
    %v96 = vsub.s32 %v58, 1
    %v97 = vsub.s32 %v58, 4294967295
    %v98 = vsub.s32 %v65, 4294967295
    %v99 = vsub.s32 %v65, 1
    %vm100 = vcmp.lt.s32.totalorder %v46, %v50
    %vm101 = vcmp.eq.s32.totalorder %v42, %v96
    %vm102 = vcmp.eq.s32.totalorder %v42, %v58
    %vm103 = vcmp.eq.s32.totalorder %v42, %v97
    %vm104 = vcmp.eq.s32.totalorder %v43, %v65
    %vm105 = vcmp.eq.s32.totalorder %v43, %v98
    %vm106 = vcmp.eq.s32.totalorder %v43, %v99
    %vm107 = vmand %vm101, %vm104
    %vm108 = vmand %vm101, %vm105
    %vm109 = vmand %vm102, %vm105
    %vm110 = vmand %vm103, %vm105
    %vm111 = vmand %vm103, %vm104
    %vm112 = vmand %vm103, %vm106
    %vm113 = vmand %vm102, %vm106
    %vm114 = vmand %vm101, %vm106
    %v115 = vsel %vm100, 1, 0
    %vm116 = vcmp.eq.s32.totalorder %v115, 1
    %vm117 = vmand %vm107, %vm116
    %vm118 = vmand %vm108, %vm116
    %vm119 = vmand %vm109, %vm116
    %vm120 = vmand %vm110, %vm116
    %vm121 = vmand %vm111, %vm116
    %vm122 = vmand %vm112, %vm116
    %vm123 = vmand %vm113, %vm116
    %vm124 = vmand %vm114, %vm116
    %v125 = vsel %vm117, 1.0, 0.0
    %v126 = vsel %vm118, 1.0, 0.0
    %v127 = vsel %vm119, 1.0, 0.0
    %v128 = vsel %vm120, 1.0, 0.0
    %v129 = vsel %vm121, 1.0, 0.0
    %v130 = vsel %vm122, 1.0, 0.0
    %v131 = vsel %vm123, 1.0, 0.0
    %v132 = vsel %vm124, 1.0, 0.0
    %v133 = vrot.slane %v125, 4
    %v134 = vmax.f32 %v125, %v133
    %v135 = vrot.slane %v134, 2
    %v136 = vmax.f32 %v134, %v135
    %v137 = vrot.slane %v136, 1
    %v138 = vmax.f32 %v136, %v137
    %v139 = vrot.slane %v126, 4
    %v140 = vmax.f32 %v126, %v139
    %v141 = vrot.slane %v140, 2
    %v142 = vmax.f32 %v140, %v141
    %v143 = vrot.slane %v142, 1
    %v144 = vmax.f32 %v142, %v143
    %v145 = vrot.slane %v127, 4
    %v146 = vmax.f32 %v127, %v145
    %v147 = vrot.slane %v146, 2
    %v148 = vmax.f32 %v146, %v147
    %v149 = vrot.slane %v148, 1
    %v150 = vmax.f32 %v148, %v149
    %v151 = vrot.slane %v128, 4
    %v152 = vmax.f32 %v128, %v151
    %v153 = vrot.slane %v152, 2
    %v154 = vmax.f32 %v152, %v153
    %v155 = vrot.slane %v154, 1
    %v156 = vmax.f32 %v154, %v155
    %v157 = vrot.slane %v129, 4
    %v158 = vmax.f32 %v129, %v157
    %v159 = vrot.slane %v158, 2
    %v160 = vmax.f32 %v158, %v159
    %v161 = vrot.slane %v160, 1
    %v162 = vmax.f32 %v160, %v161
    %v163 = vrot.slane %v130, 4
    %v164 = vmax.f32 %v130, %v163
    %v165 = vrot.slane %v164, 2
    %v166 = vmax.f32 %v164, %v165
    %v167 = vrot.slane %v166, 1
    %v168 = vmax.f32 %v166, %v167
    %v169 = vrot.slane %v131, 4
    %v170 = vmax.f32 %v131, %v169
    %v171 = vrot.slane %v170, 2
    %v172 = vmax.f32 %v170, %v171
    %v173 = vrot.slane %v172, 1
    %v174 = vmax.f32 %v172, %v173
    %v175 = vrot.slane %v132, 4
    %v176 = vmax.f32 %v132, %v175
    %v177 = vrot.slane %v176, 2
    %v178 = vmax.f32 %v176, %v177
    %v179 = vrot.slane %v178, 1
    %v180 = vmax.f32 %v178, %v179
    %vm181 = vcmp.gt.f32.partialorder %v138, 0.0
    %vm182 = vcmp.gt.f32.partialorder %v144, 0.0
    %vm183 = vcmp.gt.f32.partialorder %v150, 0.0
    %vm184 = vcmp.gt.f32.partialorder %v156, 0.0
    %vm185 = vcmp.gt.f32.partialorder %v162, 0.0
    %vm186 = vcmp.gt.f32.partialorder %v168, 0.0
    %vm187 = vcmp.gt.f32.partialorder %v174, 0.0
    %vm188 = vcmp.gt.f32.partialorder %v180, 0.0
    %v190 = vrot.slane %v95, 1
    %v191 = vrot.slane %v95, 2
    %v192 = vrot.slane %v95, 3
    %v193 = vrot.slane %v95, 4
    %v194 = vrot.slane %v95, 5
    %v195 = vrot.slane %v95, 6
    %v196 = vrot.slane %v95, 7
    %v205 = vsel %vm181, 0.0, %v95
    %v206 = vsel %vm182, 0.0, %v190
    %v207 = vsel %vm183, 0.0, %v191
    %v208 = vsel %vm184, 0.0, %v192
    %v209 = vsel %vm185, 0.0, %v193
    %v210 = vsel %vm186, 0.0, %v194
    %v211 = vsel %vm187, 0.0, %v195
    %v212 = vsel %vm188, 0.0, %v196
    %v221 = vrot.slane %v206, 7
    %vm222 = vcmask 1041409
    %v223 = vsel %vm222, %v221, %v205
    %v224 = vrot.slane %v207, 6
    %vm225 = vcmask 1042434
    %v226 = vsel %vm225, %v224, %v223
    %v227 = vrot.slane %v208, 5
    %vm228 = vcmask 1043459
    %v229 = vsel %vm228, %v227, %v226
    %v230 = vrot.slane %v209, 4
    %vm231 = vcmask 1044484
    %v232 = vsel %vm231, %v230, %v229
    %v233 = vrot.slane %v210, 3
    %vm234 = vcmask 1045509
    %v235 = vsel %vm234, %v233, %v232
    %v236 = vrot.slane %v211, 2
    %vm237 = vcmask 1046534
    %v238 = vsel %vm237, %v236, %v235
    %v239 = vrot.slane %v212, 1
    %vm240 = vcmask 1047559
    %v241 = vsel %vm240, %v239, %v238
    %v243 = vrot.slane %v241, 4
    %v244 = vadd.f32 %v241, %v243
    %v245 = vrot.slane %v244, 2
    %v246 = vadd.f32 %v244, %v245
    %v247 = vrot.slane %v246, 1
    %v248 = vadd.f32 %v246, %v247
    %vm249 = vcmp.eq.f32.partialorder %v248, 0.0
    %v250 = vsel %vm249, 1, 0
    %v251 = vlaneseq
    %v252 = vshrl.u32 %v251, 7
    %v253 = vsub.s32 0, %v252
    %v254 = vrot.slane %v250, %v253
    %vm255 = vcmp.eq.s32.totalorder %v254, 1
    %v256 = vsel %vm255, %v95, %v241
    %257 = vst [vmem:[#allocation7] sm:$0xff] %v256
    // Predicated region
    $region18: #{tpu_custom_call.1} parent=1 // pred_check
      _
    $region19: #{tpu_custom_call.1} parent=1 // pred_check_branch
      %259 = sbr.rel (0) target = $region21
    $region20: #{tpu_custom_call.1} parent=1 // pred_region
      %s261 = ssub.s32 128, 128
      %262 = vsyncadd [#allocation4], %s261
      %s264 = sshll.u32 [#allocation7], 4
      %s265 = int_to_ptr.vmem [resolvable:$true] %s264
      %267 = dma.vmem_to_hbm [thread:$0]  %s265, 128, %s2, [#allocation4]
    $region21: #{tpu_custom_call.1} parent=1 // pred_fallthru
      _
    // Predicated region
    $region22: #{tpu_custom_call.1} parent=1 // pred_check
      _
    $region23: #{tpu_custom_call.1} parent=1 // pred_check_branch
      %269 = sbr.rel (0) target = $region25
    $region24: #{tpu_custom_call.1} parent=1 // pred_region
      %270 = dma.done [#allocation4], 128
    $region25: #{tpu_custom_call.1} parent=1 // pred_fallthru
      _
    %271 = vsyncpa [#allocation3], 1
    %272 = vsyncpa [#allocation6], 1
    %273 = vsyncpa [#allocation4], 1

</llo_original>
